<compile_context>
chip_gen: v5e
topology: v5e:2x2
jax: 0.10.0
libtpu: 0.0.40
codegen_flags: <defaults>
</compile_context>

<pallas_src>
import functools

import jax
import jax.numpy as jnp
from jax.experimental import pallas as pl
from jax.experimental.pallas import tpu as pltpu


def _round_up(a: int, b: int) -> int:
    return (a + b - 1) // b * b


def _embed_onehot_kernel(ids_ref, w_ref, out_ref, *, vocab: int):
    """Gather a block of embedding rows via a one-hot MXU matmul.

    ids_ref : VMEM (tb, 1) int32    -- this block's token ids
    w_ref   : VMEM (vocab, dim)     -- full table, resident across the grid
    out_ref : VMEM (tb, dim)        -- gathered rows
    """
    tb = out_ref.shape[0]
    # One-hot in the weight dtype: each row is exactly one 1.0 and zeros, so
    # the matmul reproduces the table rows bit-for-bit (1*w + 0*...).
    col = jax.lax.broadcasted_iota(jnp.int32, (tb, vocab), 1)
    onehot = (ids_ref[...] == col).astype(w_ref.dtype)
    out_ref[...] = jnp.dot(
        onehot, w_ref[...], preferred_element_type=jnp.float32
    ).astype(out_ref.dtype)


def parallel_embedding(x_tokens: jax.Array, weight: jax.Array,
                       *, block_tokens: int = 1024) -> jax.Array:
    """Pallas embedding lookup (world_size == 1).

    x_tokens: (B, S) integer token ids in [0, vocab)
    weight:   (vocab, dim) embedding table
    returns:  (B, S, dim), same dtype as weight
    """
    B, S = x_tokens.shape
    vocab, dim = weight.shape
    n = B * S

    itemsize = jnp.dtype(weight.dtype).itemsize
    # Sublane-density requirement of the (tb, dim) output block is dtype-aware:
    # 8 rows for 4-byte, 16 for 2-byte, 32 for 1-byte element types.
    sub = max(8, 32 // itemsize)

    # Adaptive block size: big enough to amortize per-step overhead, but never
    # larger than the (rounded-up) token count -> no wasted padded work.
    tb = min(_round_up(block_tokens, sub), _round_up(n, sub))
    num_blocks = pl.cdiv(n, tb)
    n_pad = num_blocks * tb

    # ---- VMEM budgeting (explicit limit instead of a hard-coded gate) -------
    table_bytes = vocab * dim * itemsize
    out_blk_bytes = tb * dim * itemsize
    ids_blk_bytes = tb * 4
    onehot_bytes = tb * _round_up(vocab, 128) * itemsize
    # Conservative: 2x table (in case single-buffering is unavailable),
    # double-buffered output/ids blocks, one-hot temporary, compiler headroom.
    budget = (2 * table_bytes + 2 * out_blk_bytes + 2 * ids_blk_bytes
              + 2 * onehot_bytes + (4 << 20))
    try:
        vmem_cap = int(pltpu.get_tpu_info().vmem_capacity_bytes)
    except Exception:  # pragma: no cover - conservative default (v7x per-TC)
        vmem_cap = 64 << 20

    if vocab > 2048 or budget > vmem_cap:
        # TODO(synk): fall back to an HBM-resident table with manual
        # make_async_copy row-DMA gather for large vocab shards.
        raise NotImplementedError(
            "vocab too large for the VMEM-resident one-hot gather path")

    vmem_limit = int(min(vmem_cap, max(budget, 32 << 20)))

    # ---- Inputs --------------------------------------------------------------
    # Only the ids are padded (tiny int32 op); the output stays exactly (n, dim)
    # so there is no post-call slice / extra HBM copy. Out-of-range ids produce
    # an all-zero one-hot row -> zero output row (no unsafe memory access).
    flat_ids = x_tokens.reshape(n).astype(jnp.int32)
    if n_pad != n:
        flat_ids = jnp.pad(flat_ids, (0, n_pad - n))
    ids_col = flat_ids.reshape(n_pad, 1)

    kernel = functools.partial(_embed_onehot_kernel, vocab=vocab)

    def _call(weight_spec):
        return pl.pallas_call(
            kernel,
            out_shape=jax.ShapeDtypeStruct((n, dim), weight.dtype),
            grid=(num_blocks,),
            in_specs=[
                # Only the current block of ids lives on-chip; pipelined by
                # BlockSpec (no whole-sequence SMEM prefetch).
                pl.BlockSpec((tb, 1), lambda i: (i, 0)),
                # Full table, same block every step -> DMA'd once, reused.
                weight_spec,
            ],
            # Lane/sublane-dense (tb, dim) output block -> large sequential
            # writeback; partial last block (if any) is masked by the pipeline.
            out_specs=pl.BlockSpec((tb, dim), lambda i: (i, 0)),
            compiler_params=pltpu.CompilerParams(
                # Independent output blocks -> shardable across v7x's two TCs.
                dimension_semantics=("parallel",),
                vmem_limit_bytes=vmem_limit,
            ),
        )(ids_col, weight)

    try:
        # Constant-index resident table: ask for a single buffer (halves its
        # VMEM footprint versus the default double-buffering).
        w_spec = pl.BlockSpec((vocab, dim), lambda i: (0, 0),
                              pipeline_mode=pl.Buffered(1))
        out_flat = _call(w_spec)
    except Exception:
        # Fallback if this Pallas build rejects buffer_count=1.
        w_spec = pl.BlockSpec((vocab, dim), lambda i: (0, 0))
        out_flat = _call(w_spec)

    return out_flat.reshape(B, S, dim)


if __name__ == "__main__":
    # Small, deterministic setup consistent with the module's __init__:
    #   ParallelEmbedding(vocab_size=64, dim=256), world_size=1 -> part_vocab=64
    vocab_size = 64
    dim = 256
    B, S = 2, 8

    key = jax.random.PRNGKey(0)
    k_w, k_x = jax.random.split(key)

    # nn.Parameter(torch.empty(...)) is uninitialized in the module; init
    # deterministically here (synthetic weights, no checkpoint load).
    weight = jax.random.normal(k_w, (vocab_size, dim), dtype=jnp.float32)
    x = jax.random.randint(k_x, (B, S), 0, vocab_size, dtype=jnp.int32)

    y = parallel_embedding(x, weight)
    y = jax.block_until_ready(y)

    # Reference check against plain-JAX embedding lookup (exact row copies).
    y_ref = jnp.take(weight, x.reshape(-1), axis=0).reshape(B, S, dim)
    assert y.shape == (B, S, dim)
    assert jnp.allclose(y, y_ref, rtol=1e-6, atol=1e-6), \
        "Pallas embedding mismatch vs reference"

    print("KERNEL_OK")
</pallas_src>

<mosaic_0001>
module attributes {stable_mosaic.version = 11 : i64} {
  func.func @_embed_onehot_kernel(%arg0: i32, %arg1: memref<16x1xi32, #tpu.memory_space<vmem>>, %arg2: memref<64x256xf32, #tpu.memory_space<vmem>>, %arg3: memref<16x256xf32, #tpu.memory_space<vmem>>) attributes {dimension_semantics = [#tpu.dimension_semantics<parallel>], iteration_bounds = array<i64: 1>, scalar_prefetch = 0 : i64, scratch_operands = 0 : i64, tpu.core_type = #tpu.core_type<tc>, window_params = [{transform_indices = @transform_0, window_bounds = array<i64: 16, 1>}, {pipeline_mode = #tpu.pipeline_mode<synchronous>, transform_indices = @transform_1, window_bounds = array<i64: 64, 256>}, {transform_indices = @transform_2, window_bounds = array<i64: 16, 256>}]} {
    %0 = tpu.iota {dimensions = array<i32: 1>} : vector<16x64xi32>
    %c0 = arith.constant 0 : index
    %c0_0 = arith.constant 0 : index
    %1 = vector.load %arg1[%c0, %c0_0] : memref<16x1xi32, #tpu.memory_space<vmem>>, vector<16x1xi32>
    %2 = vector.broadcast %1 : vector<16x1xi32> to vector<16x64xi32>
    %3 = arith.cmpi eq, %2, %0 : vector<16x64xi32>
    %4 = arith.extui %3 : vector<16x64xi1> to vector<16x64xi32>
    %5 = arith.sitofp %4 : vector<16x64xi32> to vector<16x64xf32>
    %c0_1 = arith.constant 0 : index
    %c0_2 = arith.constant 0 : index
    %6 = vector.load %arg2[%c0_1, %c0_2] : memref<64x256xf32, #tpu.memory_space<vmem>>, vector<64x256xf32>
    %cst = arith.constant dense<0.000000e+00> : vector<16x256xf32>
    %7 = tpu.matmul %5, %6, %cst {dimension_numbers = #tpu.dot_dimension_numbers<[1], [0], [0], [1], [0, 0, 1, 1], [], []>} : vector<16x64xf32>, vector<64x256xf32>, vector<16x256xf32> -> vector<16x256xf32>
    %c0_3 = arith.constant 0 : index
    %c0_4 = arith.constant 0 : index
    %8 = vector.load %arg3[%c0_3, %c0_4] : memref<16x256xf32, #tpu.memory_space<vmem>>, vector<16x256xf32>
    tpu.vector_store %arg3[%c0_3, %c0_4], %7 {strides = array<i32>} : memref<16x256xf32, #tpu.memory_space<vmem>>, vector<16x256xf32>,
    return
  }
  func.func @transform_0(%arg0: i32) -> (i32, i32) {
    %c0_i32 = arith.constant 0 : i32
    %c0_i32_0 = arith.constant 0 : i32
    return %arg0, %c0_i32 : i32, i32
  }
  func.func @transform_1(%arg0: i32) -> (i32, i32) {
    %c0_i32 = arith.constant 0 : i32
    %c0_i32_0 = arith.constant 0 : i32
    %c0_i32_1 = arith.constant 0 : i32
    return %c0_i32, %c0_i32_0 : i32, i32
  }
  func.func @transform_2(%arg0: i32) -> (i32, i32) {
    %c0_i32 = arith.constant 0 : i32
    %c0_i32_0 = arith.constant 0 : i32
    return %arg0, %c0_i32 : i32, i32
  }
}

module attributes {stable_mosaic.version = 11 : i64} {
  func.func @_embed_onehot_kernel(%arg0: i32, %arg1: memref<16x1xi32, #tpu.memory_space<vmem>>, %arg2: memref<64x256xf32, #tpu.memory_space<vmem>>, %arg3: memref<16x256xf32, #tpu.memory_space<vmem>>) attributes {dimension_semantics = [#tpu.dimension_semantics<parallel>], iteration_bounds = array<i64: 1>, scalar_prefetch = 0 : i64, scratch_operands = 0 : i64, tpu.core_type = #tpu.core_type<tc>, window_params = [{transform_indices = @transform_0, window_bounds = array<i64: 16, 1>}, {pipeline_mode = #tpu.pipeline_mode<synchronous>, transform_indices = @transform_1, window_bounds = array<i64: 64, 256>}, {transform_indices = @transform_2, window_bounds = array<i64: 16, 256>}]} {
    %0 = tpu.iota {dimensions = array<i32: 1>} : vector<16x64xi32>
    %c0 = arith.constant 0 : index
    %c0_0 = arith.constant 0 : index
    %1 = vector.load %arg1[%c0, %c0_0] : memref<16x1xi32, #tpu.memory_space<vmem>>, vector<16x1xi32>
    %2 = vector.broadcast %1 : vector<16x1xi32> to vector<16x64xi32>
    %3 = arith.cmpi eq, %2, %0 : vector<16x64xi32>
    %4 = arith.extui %3 : vector<16x64xi1> to vector<16x64xi32>
    %5 = arith.sitofp %4 : vector<16x64xi32> to vector<16x64xf32>
    %c0_1 = arith.constant 0 : index
    %c0_2 = arith.constant 0 : index
    %6 = vector.load %arg2[%c0_1, %c0_2] : memref<64x256xf32, #tpu.memory_space<vmem>>, vector<64x256xf32>
    %cst = arith.constant dense<0.000000e+00> : vector<16x256xf32>
    %7 = tpu.matmul %5, %6, %cst {dimension_numbers = #tpu.dot_dimension_numbers<[1], [0], [0], [1], [0, 0, 1, 1], [], []>} : vector<16x64xf32>, vector<64x256xf32>, vector<16x256xf32> -> vector<16x256xf32>
    %c0_3 = arith.constant 0 : index
    %c0_4 = arith.constant 0 : index
    %8 = vector.load %arg3[%c0_3, %c0_4] : memref<16x256xf32, #tpu.memory_space<vmem>>, vector<16x256xf32>
    tpu.vector_store %arg3[%c0_3, %c0_4], %7 {strides = array<i32>} : memref<16x256xf32, #tpu.memory_space<vmem>>, vector<16x256xf32>,
    return
  }
  func.func @transform_0(%arg0: i32) -> (i32, i32) {
    %c0_i32 = arith.constant 0 : i32
    %c0_i32_0 = arith.constant 0 : i32
    return %arg0, %c0_i32 : i32, i32
  }
  func.func @transform_1(%arg0: i32) -> (i32, i32) {
    %c0_i32 = arith.constant 0 : i32
    %c0_i32_0 = arith.constant 0 : i32
    %c0_i32_1 = arith.constant 0 : i32
    return %c0_i32, %c0_i32_0 : i32, i32
  }
  func.func @transform_2(%arg0: i32) -> (i32, i32) {
    %c0_i32 = arith.constant 0 : i32
    %c0_i32_0 = arith.constant 0 : i32
    return %arg0, %c0_i32 : i32, i32
  }
}

</mosaic_0001>

<llo_original>
// kernel: tpu_custom_call.1
$region0: #{tpu_custom_call.1}
  #allocation0 [shape = 'u32[]', space=smem, size = 0x4, offset = 0x4, fixed_abs, tag = 'smem constant byte address 0x4 - core index']
  #allocation1 [shape = 'u32[72,128]{1,0:T(1,128)}', space=vmem, size = 0x9000, scoped, tag = 'internal scratch']
  %s0 = inlined_call_operand.vmem [shape: s32[16,1], index: 0, kind: input, shape index: {}]
  %s1 = inlined_call_operand.hbm [shape: f32[64,256], index: 1, kind: input, shape index: {}]
  %s2 = inlined_call_operand.hbm [shape: f32[16,256], index: 2, kind: output, shape index: {}]
  %s3 = sld [smem:[#allocation0]]
  $region22: #{tpu_custom_call.1} parent=0
    _
  %s5 = ssub.s32 1, %s3
  %s6 = scalar_select 0, %s5, %s3
  $region1: #{tpu_custom_call.1} parent=0
    #allocation2 [shape = 'u8[65536]{0}', space=vmem, size = 0x10000, scoped, tag = 'input window, operand 1, single buffered']
    #allocation3 [shape = 's32[1]{0}', space=sflag, size = 0x4, scoped, tag = 'scoped memory for tpu_custom_call.1']
    #allocation4 [shape = 's32[1]{0}', space=sflag, size = 0x4, scoped, tag = 'scoped memory for tpu_custom_call.1']
    #allocation5 [shape = 'u8[16384]{0}', space=vmem, size = 0x4000, scoped, tag = 'output window, operand 0, single buffered']
    %7 = vsyncpa [#allocation3], 0
    %8 = vsyncpa [#allocation4], 0
    // Predicated region
    $region2: #{tpu_custom_call.1} parent=1 // pred_check
      _
    $region3: #{tpu_custom_call.1} parent=1 // pred_check_branch
      %10 = sbr.rel (0) target = $region5
    $region4: #{tpu_custom_call.1} parent=1 // pred_region
      _
    $region5: #{tpu_custom_call.1} parent=1 // pred_fallthru
      _
    // Predicated region
    $region6: #{tpu_custom_call.1} parent=1 // pred_check
      _
    $region7: #{tpu_custom_call.1} parent=1 // pred_check_branch
      %12 = sbr.rel (0) target = $region9
    $region8: #{tpu_custom_call.1} parent=1 // pred_region
      %14 = vsyncadd [#allocation3], 0
      %s15 = sshll.u32 %s1, 4
      %s16 = int_to_ptr.hbm [resolvable:$true] %s15
      %s17 = sshll.u32 [#allocation2], 4
      %s18 = int_to_ptr.vmem [resolvable:$true] %s17
      %23 = dma.hbm_to_vmem [thread:$0]  %s16, 2048, %s18, [#allocation3], 256, 256, 16
    $region9: #{tpu_custom_call.1} parent=1 // pred_fallthru
      _
    // Predicated region
    $region10: #{tpu_custom_call.1} parent=1 // pred_check
      _
    $region11: #{tpu_custom_call.1} parent=1 // pred_check_branch
      %25 = sbr.rel (0) target = $region13
    $region12: #{tpu_custom_call.1} parent=1 // pred_region
      %27 = dma.done [#allocation3], 2048
    $region13: #{tpu_custom_call.1} parent=1 // pred_fallthru
      _
    %v28 = vlaneseq
    %v29 = vand.u32 %v28, 127
    %v30 = vld [vmem:[%s0] sm:$0xff]
    %v31 = vld [vmem:[%s0 + $0x8] sm:$0xff]
    %32 = vset.pattern.permute.xlu0 0
    %33 = vperm.xlu0 %32, %v30
    %v34 = vpop.permute.xlu0 %33
    %35 = vset.pattern.permute.xlu0 0
    %36 = vperm.xlu0 %35, %v31
    %v37 = vpop.permute.xlu0 %36
    %vm38 = vcmp.eq.s32.totalorder %v34, %v29
    %vm39 = vcmp.eq.s32.totalorder %v37, %v29
    %v40 = vsel %vm38, 1, 0
    %v41 = vsel %vm39, 1, 0
    %v42 = vcvt.s32.f32 %v40
    %v43 = vcvt.s32.f32 %v41
    %v44 = vld [vmem:[#allocation2] sm:$0xff]
    %v45 = vld [vmem:[#allocation2 + $0x8] sm:$0xff]
    %v46 = vld [vmem:[#allocation2 + $0x10] sm:$0xff]
    %v47 = vld [vmem:[#allocation2 + $0x18] sm:$0xff]
    %v48 = vld [vmem:[#allocation2 + $0x20] sm:$0xff]
    %v49 = vld [vmem:[#allocation2 + $0x28] sm:$0xff]
    %v50 = vld [vmem:[#allocation2 + $0x30] sm:$0xff]
    %v51 = vld [vmem:[#allocation2 + $0x38] sm:$0xff]
    %v52 = vld [vmem:[#allocation2 + $0x40] sm:$0xff]
    %v53 = vld [vmem:[#allocation2 + $0x48] sm:$0xff]
    %v54 = vld [vmem:[#allocation2 + $0x50] sm:$0xff]
    %v55 = vld [vmem:[#allocation2 + $0x58] sm:$0xff]
    %v56 = vld [vmem:[#allocation2 + $0x60] sm:$0xff]
    %v57 = vld [vmem:[#allocation2 + $0x68] sm:$0xff]
    %v58 = vld [vmem:[#allocation2 + $0x70] sm:$0xff]
    %v59 = vld [vmem:[#allocation2 + $0x78] sm:$0xff]
    %vm60 = vcmask 523264
    %v62 = vsel %vm60, %v42, 0
    %v65 = vsel %vm60, %v43, 0
    %67 = vmatpush.msra.mxu0 0.0
    %68 = vmatpush.msra.mxu0 0.0
    %69 = vmatpush.msra.mxu0 0.0
    %70 = vmatpush.msra.mxu0 0.0
    %71 = vmatpush.msra.mxu0 0.0
    %72 = vmatpush.msra.mxu0 0.0
    %73 = vmatpush.msra.mxu0 0.0
    %74 = vmatpush.msra.mxu0 0.0
    %75 = vmatpush.msra.mxu0 %v58
    %76 = vmatpush.msra.mxu0 %v56
    %77 = vmatpush.msra.mxu0 %v54
    %78 = vmatpush.msra.mxu0 %v52
    %79 = vmatpush.msra.mxu0 %v50
    %80 = vmatpush.msra.mxu0 %v48
    %81 = vmatpush.msra.mxu0 %v46
    %82 = vmatpush.msra.mxu0 %v44
    %83 = vmatmul.f32.gmra.mxu0 %v62
    %v84 = vpop.f32.mrf.mxu0
    %v85 = vadd.f32 0.0, %v84
    %86 = vmatmul.f32.gmra.mxu0 %v65
    %v87 = vpop.f32.mrf.mxu0
    %v88 = vadd.f32 0.0, %v87
    %89 = vdwg.mxu0
    %90 = vmatpush.msra.mxu0 0.0
    %91 = vmatpush.msra.mxu0 0.0
    %92 = vmatpush.msra.mxu0 0.0
    %93 = vmatpush.msra.mxu0 0.0
    %94 = vmatpush.msra.mxu0 0.0
    %95 = vmatpush.msra.mxu0 0.0
    %96 = vmatpush.msra.mxu0 0.0
    %97 = vmatpush.msra.mxu0 0.0
    %98 = vmatpush.msra.mxu0 %v59
    %99 = vmatpush.msra.mxu0 %v57
    %100 = vmatpush.msra.mxu0 %v55
    %101 = vmatpush.msra.mxu0 %v53
    %102 = vmatpush.msra.mxu0 %v51
    %103 = vmatpush.msra.mxu0 %v49
    %104 = vmatpush.msra.mxu0 %v47
    %105 = vmatpush.msra.mxu0 %v45
    %106 = vmatmul.f32.gmra.mxu0 %v62
    %v107 = vpop.f32.mrf.mxu0
    %v108 = vadd.f32 0.0, %v107
    %109 = vmatmul.f32.gmra.mxu0 %v65
    %v110 = vpop.f32.mrf.mxu0
    %v111 = vadd.f32 0.0, %v110
    %112 = vdwg.mxu0
    %113 = vst [vmem:[#allocation5] sm:$0xff] %v85
    %114 = vst [vmem:[#allocation5 + $0x8] sm:$0xff] %v108
    %115 = vst [vmem:[#allocation5 + $0x10] sm:$0xff] %v88
    %116 = vst [vmem:[#allocation5 + $0x18] sm:$0xff] %v111
    // Predicated region
    $region14: #{tpu_custom_call.1} parent=1 // pred_check
      _
    $region15: #{tpu_custom_call.1} parent=1 // pred_check_branch
      %118 = sbr.rel (0) target = $region17
    $region16: #{tpu_custom_call.1} parent=1 // pred_region
      %120 = vsyncadd [#allocation4], 0
      %s121 = sshll.u32 [#allocation5], 4
      %s122 = int_to_ptr.vmem [resolvable:$true] %s121
      %s123 = sshll.u32 %s2, 4
      %s124 = int_to_ptr.hbm [resolvable:$true] %s123
      %129 = dma.vmem_to_hbm [thread:$0]  %s122, 512, %s124, [#allocation4], 256, 256, 16
    $region17: #{tpu_custom_call.1} parent=1 // pred_fallthru
      _
    // Predicated region
    $region18: #{tpu_custom_call.1} parent=1 // pred_check
      _
    $region19: #{tpu_custom_call.1} parent=1 // pred_check_branch
      %131 = sbr.rel (0) target = $region21
    $region20: #{tpu_custom_call.1} parent=1 // pred_region
      %133 = dma.done [#allocation4], 512
    $region21: #{tpu_custom_call.1} parent=1 // pred_fallthru
      _
    %134 = vsyncpa [#allocation3], 1
    %135 = vsyncpa [#allocation4], 1

// kernel: tpu_custom_call.1
$region0: #{tpu_custom_call.1}
  #allocation0 [shape = 'u32[]', space=smem, size = 0x4, offset = 0x4, fixed_abs, tag = 'smem constant byte address 0x4 - core index']
  #allocation1 [shape = 'u32[72,128]{1,0:T(1,128)}', space=vmem, size = 0x9000, scoped, tag = 'internal scratch']
  %s0 = inlined_call_operand.vmem [shape: s32[16,1], index: 0, kind: input, shape index: {}]
  %s1 = inlined_call_operand.hbm [shape: f32[64,256], index: 1, kind: input, shape index: {}]
  %s2 = inlined_call_operand.hbm [shape: f32[16,256], index: 2, kind: output, shape index: {}]
  %s3 = sld [smem:[#allocation0]]
  $region22: #{tpu_custom_call.1} parent=0
    _
  %s5 = ssub.s32 1, %s3
  %s6 = scalar_select 0, %s5, %s3
  $region1: #{tpu_custom_call.1} parent=0
    #allocation2 [shape = 'u8[65536]{0}', space=vmem, size = 0x10000, scoped, tag = 'input window, operand 1, single buffered']
    #allocation3 [shape = 's32[1]{0}', space=sflag, size = 0x4, scoped, tag = 'scoped memory for tpu_custom_call.1']
    #allocation4 [shape = 's32[1]{0}', space=sflag, size = 0x4, scoped, tag = 'scoped memory for tpu_custom_call.1']
    #allocation5 [shape = 'u8[16384]{0}', space=vmem, size = 0x4000, scoped, tag = 'output window, operand 0, single buffered']
    %7 = vsyncpa [#allocation3], 0
    %8 = vsyncpa [#allocation4], 0
    // Predicated region
    $region2: #{tpu_custom_call.1} parent=1 // pred_check
      _
    $region3: #{tpu_custom_call.1} parent=1 // pred_check_branch
      %10 = sbr.rel (0) target = $region5
    $region4: #{tpu_custom_call.1} parent=1 // pred_region
      _
    $region5: #{tpu_custom_call.1} parent=1 // pred_fallthru
      _
    // Predicated region
    $region6: #{tpu_custom_call.1} parent=1 // pred_check
      _
    $region7: #{tpu_custom_call.1} parent=1 // pred_check_branch
      %12 = sbr.rel (0) target = $region9
    $region8: #{tpu_custom_call.1} parent=1 // pred_region
      %14 = vsyncadd [#allocation3], 0
      %s15 = sshll.u32 %s1, 4
      %s16 = int_to_ptr.hbm [resolvable:$true] %s15
      %s17 = sshll.u32 [#allocation2], 4
      %s18 = int_to_ptr.vmem [resolvable:$true] %s17
      %23 = dma.hbm_to_vmem [thread:$0]  %s16, 2048, %s18, [#allocation3], 256, 256, 16
    $region9: #{tpu_custom_call.1} parent=1 // pred_fallthru
      _
    // Predicated region
    $region10: #{tpu_custom_call.1} parent=1 // pred_check
      _
    $region11: #{tpu_custom_call.1} parent=1 // pred_check_branch
      %25 = sbr.rel (0) target = $region13
    $region12: #{tpu_custom_call.1} parent=1 // pred_region
      %27 = dma.done [#allocation3], 2048
    $region13: #{tpu_custom_call.1} parent=1 // pred_fallthru
      _
    %v28 = vlaneseq
    %v29 = vand.u32 %v28, 127
    %v30 = vld [vmem:[%s0] sm:$0xff]
    %v31 = vld [vmem:[%s0 + $0x8] sm:$0xff]
    %32 = vset.pattern.permute.xlu0 0
    %33 = vperm.xlu0 %32, %v30
    %v34 = vpop.permute.xlu0 %33
    %35 = vset.pattern.permute.xlu0 0
    %36 = vperm.xlu0 %35, %v31
    %v37 = vpop.permute.xlu0 %36
    %vm38 = vcmp.eq.s32.totalorder %v34, %v29
    %vm39 = vcmp.eq.s32.totalorder %v37, %v29
    %v40 = vsel %vm38, 1, 0
    %v41 = vsel %vm39, 1, 0
    %v42 = vcvt.s32.f32 %v40
    %v43 = vcvt.s32.f32 %v41
    %v44 = vld [vmem:[#allocation2] sm:$0xff]
    %v45 = vld [vmem:[#allocation2 + $0x8] sm:$0xff]
    %v46 = vld [vmem:[#allocation2 + $0x10] sm:$0xff]
    %v47 = vld [vmem:[#allocation2 + $0x18] sm:$0xff]
    %v48 = vld [vmem:[#allocation2 + $0x20] sm:$0xff]
    %v49 = vld [vmem:[#allocation2 + $0x28] sm:$0xff]
    %v50 = vld [vmem:[#allocation2 + $0x30] sm:$0xff]
    %v51 = vld [vmem:[#allocation2 + $0x38] sm:$0xff]
    %v52 = vld [vmem:[#allocation2 + $0x40] sm:$0xff]
    %v53 = vld [vmem:[#allocation2 + $0x48] sm:$0xff]
    %v54 = vld [vmem:[#allocation2 + $0x50] sm:$0xff]
    %v55 = vld [vmem:[#allocation2 + $0x58] sm:$0xff]
    %v56 = vld [vmem:[#allocation2 + $0x60] sm:$0xff]
    %v57 = vld [vmem:[#allocation2 + $0x68] sm:$0xff]
    %v58 = vld [vmem:[#allocation2 + $0x70] sm:$0xff]
    %v59 = vld [vmem:[#allocation2 + $0x78] sm:$0xff]
    %vm60 = vcmask 523264
    %v62 = vsel %vm60, %v42, 0
    %v65 = vsel %vm60, %v43, 0
    %67 = vmatpush.msra.mxu0 0.0
    %68 = vmatpush.msra.mxu0 0.0
    %69 = vmatpush.msra.mxu0 0.0
    %70 = vmatpush.msra.mxu0 0.0
    %71 = vmatpush.msra.mxu0 0.0
    %72 = vmatpush.msra.mxu0 0.0
    %73 = vmatpush.msra.mxu0 0.0
    %74 = vmatpush.msra.mxu0 0.0
    %75 = vmatpush.msra.mxu0 %v58
    %76 = vmatpush.msra.mxu0 %v56
    %77 = vmatpush.msra.mxu0 %v54
    %78 = vmatpush.msra.mxu0 %v52
    %79 = vmatpush.msra.mxu0 %v50
    %80 = vmatpush.msra.mxu0 %v48
    %81 = vmatpush.msra.mxu0 %v46
    %82 = vmatpush.msra.mxu0 %v44
    %83 = vmatmul.f32.gmra.mxu0 %v62
    %v84 = vpop.f32.mrf.mxu0
    %v85 = vadd.f32 0.0, %v84
    %86 = vmatmul.f32.gmra.mxu0 %v65
    %v87 = vpop.f32.mrf.mxu0
    %v88 = vadd.f32 0.0, %v87
    %89 = vdwg.mxu0
    %90 = vmatpush.msra.mxu0 0.0
    %91 = vmatpush.msra.mxu0 0.0
    %92 = vmatpush.msra.mxu0 0.0
    %93 = vmatpush.msra.mxu0 0.0
    %94 = vmatpush.msra.mxu0 0.0
    %95 = vmatpush.msra.mxu0 0.0
    %96 = vmatpush.msra.mxu0 0.0
    %97 = vmatpush.msra.mxu0 0.0
    %98 = vmatpush.msra.mxu0 %v59
    %99 = vmatpush.msra.mxu0 %v57
    %100 = vmatpush.msra.mxu0 %v55
    %101 = vmatpush.msra.mxu0 %v53
    %102 = vmatpush.msra.mxu0 %v51
    %103 = vmatpush.msra.mxu0 %v49
    %104 = vmatpush.msra.mxu0 %v47
    %105 = vmatpush.msra.mxu0 %v45
    %106 = vmatmul.f32.gmra.mxu0 %v62
    %v107 = vpop.f32.mrf.mxu0
    %v108 = vadd.f32 0.0, %v107
    %109 = vmatmul.f32.gmra.mxu0 %v65
    %v110 = vpop.f32.mrf.mxu0
    %v111 = vadd.f32 0.0, %v110
    %112 = vdwg.mxu0
    %113 = vst [vmem:[#allocation5] sm:$0xff] %v85
    %114 = vst [vmem:[#allocation5 + $0x8] sm:$0xff] %v108
    %115 = vst [vmem:[#allocation5 + $0x10] sm:$0xff] %v88
    %116 = vst [vmem:[#allocation5 + $0x18] sm:$0xff] %v111
    // Predicated region
    $region14: #{tpu_custom_call.1} parent=1 // pred_check
      _
    $region15: #{tpu_custom_call.1} parent=1 // pred_check_branch
      %118 = sbr.rel (0) target = $region17
    $region16: #{tpu_custom_call.1} parent=1 // pred_region
      %120 = vsyncadd [#allocation4], 0
      %s121 = sshll.u32 [#allocation5], 4
      %s122 = int_to_ptr.vmem [resolvable:$true] %s121
      %s123 = sshll.u32 %s2, 4
      %s124 = int_to_ptr.hbm [resolvable:$true] %s123
      %129 = dma.vmem_to_hbm [thread:$0]  %s122, 512, %s124, [#allocation4], 256, 256, 16
    $region17: #{tpu_custom_call.1} parent=1 // pred_fallthru
      _
    // Predicated region
    $region18: #{tpu_custom_call.1} parent=1 // pred_check
      _
    $region19: #{tpu_custom_call.1} parent=1 // pred_check_branch
      %131 = sbr.rel (0) target = $region21
    $region20: #{tpu_custom_call.1} parent=1 // pred_region
      %133 = dma.done [#allocation4], 512
    $region21: #{tpu_custom_call.1} parent=1 // pred_fallthru
      _
    %134 = vsyncpa [#allocation3], 1
    %135 = vsyncpa [#allocation4], 1

</llo_original>
